<compile_context>
chip_gen: v6e
topology: v6e:2x2x1
jax: 0.10.0
libtpu: 0.0.40
codegen_flags: <defaults>
</compile_context>

<pallas_src>
import math

import jax
import jax.numpy as jnp
from jax.experimental import pallas as pl
from jax.experimental.pallas import tpu as pltpu

_C = math.sqrt(2.0 / math.pi)            # sqrt(2/pi)
_K = _C * 0.044715                        # fold 0.044715 into the constant


def _gelu_kernel(x_ref, o_ref):
    x = x_ref[...]
    # inner = sqrt(2/pi) * (x + 0.044715 x^3)  ==  x * (C + K * x^2)
    inner = x * (_C + _K * (x * x))
    o_ref[...] = 0.5 * x * (1.0 + jnp.tanh(inner))


def gelu_pallas(x, *, max_block_elems=512 * 1024):
    """Tanh-approximation GELU. Accepts any shape; returns same shape/dtype."""
    orig_shape = x.shape
    orig_dtype = x.dtype
    n = x.size
    itemsize = jnp.dtype(orig_dtype).itemsize

    x_flat = jnp.ravel(x)

    # Pad only when the flat length is not a multiple of 128 (rare for NN
    # shapes); gelu(0) == 0 and the tail is sliced off afterwards.
    pad = (-n) % 128
    if pad:
        x_flat = jnp.pad(x_flat, (0, pad))
    n_pad = n + pad

    # Pick the widest lane dimension (multiple of 128) that divides n_pad.
    lane = 128
    for cand in (1024, 512, 256):
        if n_pad % cand == 0:
            lane = cand
            break
    rows = n_pad // lane

    # Target ~max_block_elems elements per block (2 MiB of f32 at the default),
    # so in+out double-buffered stays ~8 MiB — safe on v5e/v6e/v7x.
    target_rows = max(1, max_block_elems // lane)
    if rows <= target_rows:
        tile_rows = rows          # single block: block shape == full array dims
    else:
        # multiple of 16 so the block stays (sublane,lane)-aligned for f32/bf16
        tile_rows = max(16, (target_rows // 16) * 16)

    grid = (pl.cdiv(rows, tile_rows),)
    x2d = x_flat.reshape(rows, lane)

    cost = pl.CostEstimate(
        flops=8 * n_pad,
        transcendentals=n_pad,
        bytes_accessed=2 * n_pad * itemsize,
    )

    out2d = pl.pallas_call(
        _gelu_kernel,
        out_shape=jax.ShapeDtypeStruct((rows, lane), orig_dtype),
        grid_spec=pl.GridSpec(
            grid=grid,
            in_specs=[pl.BlockSpec((tile_rows, lane), lambda i: (i, 0))],
            out_specs=pl.BlockSpec((tile_rows, lane), lambda i: (i, 0)),
        ),
        compiler_params=pltpu.CompilerParams(
            dimension_semantics=("parallel",),
        ),
        cost_estimate=cost,
    )(x2d)

    out_flat = out2d.reshape(-1)
    if pad:
        out_flat = out_flat[:n]
    return out_flat.reshape(orig_shape)


def gelu_ref(x):
    c = math.sqrt(2.0 / math.pi)
    return 0.5 * x * (1.0 + jnp.tanh(c * (x + 0.044715 * jnp.power(x, 3))))


if __name__ == "__main__":
    key = jax.random.PRNGKey(0)
    x = jax.random.normal(key, (2, 4, 16, 16), dtype=jnp.float32)

    out = gelu_pallas(x)
    out = jax.block_until_ready(out)

    expected = gelu_ref(x)
    assert out.shape == x.shape and out.dtype == x.dtype
    assert jnp.allclose(out, expected, atol=1e-6, rtol=1e-6), "mismatch vs reference"

    print("KERNEL_OK")
</pallas_src>

<mosaic_0001>
module attributes {stable_mosaic.version = 11 : i64} {
  func.func @_gelu_kernel(%arg0: i32, %arg1: memref<2x1024xf32, #tpu.memory_space<vmem>>, %arg2: memref<2x1024xf32, #tpu.memory_space<vmem>>) attributes {dimension_semantics = [#tpu.dimension_semantics<parallel>], iteration_bounds = array<i64: 1>, scalar_prefetch = 0 : i64, scratch_operands = 0 : i64, tpu.core_type = #tpu.core_type<tc>, window_params = [{transform_indices = @transform_0, window_bounds = array<i64: 2, 1024>}, {transform_indices = @transform_1, window_bounds = array<i64: 2, 1024>}]} {
    %c0 = arith.constant 0 : index
    %c0_0 = arith.constant 0 : index
    %0 = vector.load %arg1[%c0, %c0_0] : memref<2x1024xf32, #tpu.memory_space<vmem>>, vector<2x1024xf32>
    %1 = arith.mulf %0, %0 : vector<2x1024xf32>
    %cst = arith.constant 0.0356774069 : f32
    %2 = vector.broadcast %cst : f32 to vector<2x1024xf32>
    %3 = arith.mulf %2, %1 : vector<2x1024xf32>
    %cst_1 = arith.constant 0.797884583 : f32
    %4 = vector.broadcast %cst_1 : f32 to vector<2x1024xf32>
    %5 = arith.addf %4, %3 : vector<2x1024xf32>
    %6 = arith.mulf %0, %5 : vector<2x1024xf32>
    %cst_2 = arith.constant 5.000000e-01 : f32
    %7 = vector.broadcast %cst_2 : f32 to vector<2x1024xf32>
    %8 = arith.mulf %7, %0 : vector<2x1024xf32>
    %9 = math.tanh %6 : vector<2x1024xf32>
    %cst_3 = arith.constant 1.000000e+00 : f32
    %10 = vector.broadcast %cst_3 : f32 to vector<2x1024xf32>
    %11 = arith.addf %10, %9 : vector<2x1024xf32>
    %12 = arith.mulf %8, %11 : vector<2x1024xf32>
    %c0_4 = arith.constant 0 : index
    %c0_5 = arith.constant 0 : index
    %13 = vector.load %arg2[%c0_4, %c0_5] : memref<2x1024xf32, #tpu.memory_space<vmem>>, vector<2x1024xf32>
    tpu.vector_store %arg2[%c0_4, %c0_5], %12 {strides = array<i32>} : memref<2x1024xf32, #tpu.memory_space<vmem>>, vector<2x1024xf32>,
    return
  }
  func.func @transform_0(%arg0: i32) -> (i32, i32) {
    %c0_i32 = arith.constant 0 : i32
    %c0_i32_0 = arith.constant 0 : i32
    return %arg0, %c0_i32 : i32, i32
  }
  func.func @transform_1(%arg0: i32) -> (i32, i32) {
    %c0_i32 = arith.constant 0 : i32
    %c0_i32_0 = arith.constant 0 : i32
    return %arg0, %c0_i32 : i32, i32
  }
}

</mosaic_0001>

<llo_original>
// kernel: tpu_custom_call.1
$region0: #{tpu_custom_call.1}
  #allocation0 [shape = 'u32[]', space=smem, size = 0x4, offset = 0x4, fixed_abs, tag = 'smem constant byte address 0x4 - core index']
  #allocation1 [shape = 'u32[144,128]{1,0:T(1,128)}', space=vmem, size = 0x12000, scoped, tag = 'internal scratch']
  %s0 = inlined_call_operand.hbm [shape: f32[2,1024], index: 0, kind: input, shape index: {}]
  %s1 = inlined_call_operand.hbm [shape: f32[2,1024], index: 1, kind: output, shape index: {}]
  %s2 = sld [smem:[#allocation0]]
  $region18: #{tpu_custom_call.1} parent=0
    _
  %s4 = ssub.s32 1, %s2
  %s5 = scalar_select 0, %s4, %s2
  $region1: #{tpu_custom_call.1} parent=0
    #allocation2 [shape = 'u8[8192]{0}', space=vmem, size = 0x2000, scoped, tag = 'input window, operand 0, single buffered']
    #allocation3 [shape = 's32[1]{0}', space=sflag, size = 0x4, scoped, tag = 'scoped memory for tpu_custom_call.1']
    #allocation4 [shape = 's32[1]{0}', space=sflag, size = 0x4, scoped, tag = 'scoped memory for tpu_custom_call.1']
    #allocation5 [shape = 'u8[8192]{0}', space=vmem, size = 0x2000, scoped, tag = 'output window, operand 0, single buffered']
    %6 = vsyncpa [#allocation3], 0
    %7 = vsyncpa [#allocation4], 0
    // Predicated region
    $region2: #{tpu_custom_call.1} parent=1 // pred_check
      _
    $region3: #{tpu_custom_call.1} parent=1 // pred_check_branch
      %9 = sbr.rel (0) target = $region5
    $region4: #{tpu_custom_call.1} parent=1 // pred_region
      %s11 = ssub.s32 256, 256
      %12 = vsyncadd [#allocation3], %s11
      %s14 = sshll.u32 [#allocation2], 4
      %s15 = int_to_ptr.vmem [resolvable:$true] %s14
      %17 = dma.hbm_to_vmem [thread:$0]  %s0, 256, %s15, [#allocation3]
    $region5: #{tpu_custom_call.1} parent=1 // pred_fallthru
      _
    // Predicated region
    $region6: #{tpu_custom_call.1} parent=1 // pred_check
      _
    $region7: #{tpu_custom_call.1} parent=1 // pred_check_branch
      %19 = sbr.rel (0) target = $region9
    $region8: #{tpu_custom_call.1} parent=1 // pred_region
      %20 = dma.done [#allocation3], 256
    $region9: #{tpu_custom_call.1} parent=1 // pred_fallthru
      _
    %v21 = vld [vmem:[#allocation2] sm:$0xff]
    %v22 = vld [vmem:[#allocation2 + $0x8] sm:$0xff]
    %v23 = vmul.f32 %v21, %v21
    %v24 = vmul.f32 %v22, %v22
    %v25 = vmul.f32 %v23, 0.035677407
    %v26 = vmul.f32 %v24, 0.035677407
    %v27 = vadd.f32 %v25, 0.7978846
    %v28 = vadd.f32 %v26, 0.7978846
    %v29 = vmul.f32 %v21, %v27
    %v30 = vmul.f32 %v22, %v28
    %v31 = vmul.f32 %v21, 0.5
    %v32 = vmul.f32 %v22, 0.5
    %v33 = vtanh.pop %v29
    %v34 = vtanh.pop %v30
    %v35 = vadd.f32 %v33, 1.0
    %v36 = vadd.f32 %v34, 1.0
    %v37 = vmul.f32 %v31, %v35
    %v38 = vmul.f32 %v32, %v36
    %39 = vst [vmem:[#allocation5] sm:$0xff] %v37
    %40 = vst [vmem:[#allocation5 + $0x8] sm:$0xff] %v38
    // Predicated region
    $region10: #{tpu_custom_call.1} parent=1 // pred_check
      _
    $region11: #{tpu_custom_call.1} parent=1 // pred_check_branch
      %42 = sbr.rel (0) target = $region13
    $region12: #{tpu_custom_call.1} parent=1 // pred_region
      %s44 = ssub.s32 256, 256
      %45 = vsyncadd [#allocation4], %s44
      %s47 = sshll.u32 [#allocation5], 4
      %s48 = int_to_ptr.vmem [resolvable:$true] %s47
      %50 = dma.vmem_to_hbm [thread:$0]  %s48, 256, %s1, [#allocation4]
    $region13: #{tpu_custom_call.1} parent=1 // pred_fallthru
      _
    // Predicated region
    $region14: #{tpu_custom_call.1} parent=1 // pred_check
      _
    $region15: #{tpu_custom_call.1} parent=1 // pred_check_branch
      %52 = sbr.rel (0) target = $region17
    $region16: #{tpu_custom_call.1} parent=1 // pred_region
      %53 = dma.done [#allocation4], 256
    $region17: #{tpu_custom_call.1} parent=1 // pred_fallthru
      _
    %54 = vsyncpa [#allocation3], 1
    %55 = vsyncpa [#allocation4], 1

</llo_original>
